<compile_context>
chip_gen: v7x
topology: tpu7x:2x2x1
jax: 0.10.0
libtpu: 0.0.40
codegen_flags: <defaults>
</compile_context>

<pallas_src>
import functools

import jax
import jax.numpy as jnp
from jax import lax
from jax.experimental import pallas as pl
from jax.experimental.pallas import tpu as pltpu


BN_EPS = 1e-5
LANE = 128


def _round_up(x, m):
    return ((x + m - 1) // m) * m


# ----------------------------------------------------------------------------
# Fused Pallas kernel: all heads x all conv layers in one invocation.
# ----------------------------------------------------------------------------
def _fused_stack_kernel(*refs, L, K, pad, layer_couts, relu_flags, cact):
    # refs = (x_ref, w_0, b_0, ..., w_{n-1}, b_{n-1}, out_ref, act_scratch)
    #   x_ref : (Bblk, L, cact)           f32 channel-padded NLC input block
    #   w_l   : (K, cact, cout_l)         bf16 fused per-tap weight (BN folded)
    #   b_l   : (1, cout_l)               f32 fused bias
    #   out   : (Bblk, L, cout_pad)       f32 (cout_pad = multiple of 128)
    #   act   : (Bblk, L + 2*pad, cact)   f32 persistent zero-haloed activation
    x_ref = refs[0]
    out_ref = refs[-2]
    act = refs[-1]
    wb = refs[1:-2]
    n_layers = len(layer_couts)
    bblk = x_ref.shape[0]

    # Halo rows carry the conv zero-padding.  The interior is fully rewritten
    # every layer, so zeroing the halos once per invocation is sufficient.
    if pad > 0:
        zeros_halo = jnp.zeros((bblk, pad, cact), act.dtype)
        act[:, 0:pad, :] = zeros_halo
        act[:, pad + L:L + 2 * pad, :] = zeros_halo
    # Stage the input block into the haloed scratch (full-lane store).
    act[:, pad:pad + L, :] = x_ref[...].astype(act.dtype)

    for li in range(n_layers):
        w_ref = wb[2 * li]            # (K, cact, cout_l) bf16
        b_ref = wb[2 * li + 1]        # (1, cout_l)       f32
        cout_l = layer_couts[li]
        # Conv1d as K accumulating matmuls over the haloed activation; batch is
        # folded into M.  bf16 operands feed the MXU, accumulation in f32.
        acc = jnp.zeros((bblk * L, cout_l), jnp.float32)
        for k in range(K):
            a = act[:, k:k + L, :].reshape(bblk * L, cact).astype(jnp.bfloat16)
            acc = acc + jnp.dot(a, w_ref[k], preferred_element_type=jnp.float32)
        y = acc + b_ref[...]                         # bias in f32
        if relu_flags[li]:
            y = jnp.maximum(y, 0.0)                  # ReLU in f32
        if li + 1 < n_layers:
            # Hidden widths are padded to cact -> full-lane interior store.
            act[:, pad:pad + L, :] = y.reshape(bblk, L, cact).astype(act.dtype)
        else:
            # Lane-dense final store (cout_pad is a multiple of 128).
            out_ref[...] = y.reshape(bblk, L, cout_l).astype(out_ref.dtype)


def fused_stack_pallas(x_nlc, weights, biases, *, K, relu_flags, layer_couts, cact):
    """x_nlc: (B, L, cact) f32; weights[l]: (K, cact, cout_l) bf16; biases[l]: (1, cout_l) f32."""
    B, L, _ = x_nlc.shape
    pad = K // 2
    cout_pad = layer_couts[-1]

    # v7x megacore: shard the batch across TensorCores once the problem is big
    # enough to amortise per-core prologue; tiny inputs run as a single block.
    use_batch_grid = (B > 1) and (B * L >= 4096)
    b_blk = 1 if use_batch_grid else B
    grid = (B // b_blk,)

    in_specs = [pl.BlockSpec((b_blk, L, cact), lambda b: (b, 0, 0))]
    flat_args = []
    for w, bvec in zip(weights, biases):
        flat_args += [w, bvec]
        # Constant block index across the grid -> weights stay resident in VMEM.
        in_specs.append(pl.BlockSpec(tuple(int(d) for d in w.shape),
                                     lambda b: (0, 0, 0)))
        in_specs.append(pl.BlockSpec(tuple(int(d) for d in bvec.shape),
                                     lambda b: (0, 0)))
    out_specs = pl.BlockSpec((b_blk, L, cout_pad), lambda b: (b, 0, 0))
    scratch_shapes = [pltpu.VMEM((b_blk, L + 2 * pad, cact), jnp.float32)]

    # Explicit VMEM budget (v7x: 64 MiB physical, 32 MiB default scoped).
    def _nbytes(a):
        return int(a.size) * a.dtype.itemsize
    weight_bytes = sum(_nbytes(w) for w in weights) + sum(_nbytes(b) for b in biases)
    block_bytes = 2 * (b_blk * L * cact * 4 + b_blk * L * cout_pad * 4)  # dbl-buffered
    scratch_bytes = b_blk * (L + 2 * pad) * cact * 4
    vmem_limit = int(min(max(2 * (weight_bytes + block_bytes + scratch_bytes),
                             16 << 20), 64 << 20))

    kern = functools.partial(
        _fused_stack_kernel, L=L, K=K, pad=pad,
        layer_couts=tuple(layer_couts), relu_flags=tuple(relu_flags), cact=cact)

    return pl.pallas_call(
        kern,
        out_shape=jax.ShapeDtypeStruct((B, L, cout_pad), jnp.float32),
        grid_spec=pltpu.PrefetchScalarGridSpec(
            num_scalar_prefetch=0,
            grid=grid,
            in_specs=in_specs,
            out_specs=out_specs,
            scratch_shapes=scratch_shapes),
        compiler_params=pltpu.CompilerParams(
            dimension_semantics=("parallel",),
            vmem_limit_bytes=vmem_limit),
    )(x_nlc, *flat_args)


# ----------------------------------------------------------------------------
# Parameter construction (deterministic, synthetic — mirrors __init__ shapes).
# ----------------------------------------------------------------------------
def build_params(key, input_channels, head_channels, kernel_size,
                 sep_head_dict, init_bias=-2.19):
    params = {}
    for name, cfg in sep_head_dict.items():
        out_channels = cfg['out_channels']
        num_conv = cfg['num_conv']
        layers = []
        for _ in range(num_conv - 1):
            key, kw, kg, kb, km, kv = jax.random.split(key, 6)
            w = jax.random.normal(kw, (kernel_size, input_channels, head_channels),
                                  jnp.float32) * 0.05
            gamma = 1.0 + 0.1 * jax.random.normal(kg, (head_channels,), jnp.float32)
            beta = 0.1 * jax.random.normal(kb, (head_channels,), jnp.float32)
            rmean = 0.1 * jax.random.normal(km, (head_channels,), jnp.float32)
            rvar = 1.0 + 0.1 * jax.random.uniform(kv, (head_channels,), jnp.float32)
            layers.append(dict(w=w, gamma=gamma, beta=beta, rmean=rmean, rvar=rvar))
        key, kw, kb = jax.random.split(key, 3)
        w_last = jax.random.normal(
            kw, (kernel_size, head_channels, out_channels), jnp.float32) * 0.05
        if 'hm' in name:
            b_last = jnp.full((out_channels,), init_bias, jnp.float32)
        else:
            b_last = 0.01 * jax.random.normal(kb, (out_channels,), jnp.float32)
        layers.append(dict(w=w_last, b=b_last))
        params[name] = layers
    return params


# ----------------------------------------------------------------------------
# Head fusion: fold eval BN, concat layer-0 weights over heads, block-diag the
# rest, and lane-pad every channel dimension to a multiple of 128.
# Done eagerly once (weights are constants); only arrays reach jit.
# ----------------------------------------------------------------------------
def fuse_head_params(params, head_names, kernel_size, input_channels, head_channels):
    num_heads = len(head_names)
    num_conv = len(params[head_names[0]])
    for n in head_names:
        assert len(params[n]) == num_conv, "fusion assumes equal num_conv per head"
    if num_conv > 2:
        assert input_channels == head_channels  # required by the module itself
    out_channels = [int(params[n][-1]['w'].shape[-1]) for n in head_names]
    out_off = [0]
    for c in out_channels:
        out_off.append(out_off[-1] + c)

    hidden_real = num_heads * head_channels
    cact = max(_round_up(input_channels, LANE), _round_up(hidden_real, LANE))
    cout_pad = _round_up(out_off[-1], LANE)
    # TODO(synk): for many heads (hidden_real >> 128) the block-diag fusion wastes
    # MXU passes on zeros; switch to a per-head grid axis in that regime.

    weights, biases, relu_flags, layer_couts = [], [], [], []
    for li in range(num_conv):
        is_hidden = li < num_conv - 1
        cout_l = cact if is_hidden else cout_pad
        W = jnp.zeros((kernel_size, cact, cout_l), jnp.float32)
        bvec = jnp.zeros((cout_l,), jnp.float32)
        for h, name in enumerate(head_names):
            layer = params[name][li]
            if is_hidden:   # conv (no bias) + eval BN + ReLU  ->  fold BN
                s = layer['gamma'] * lax.rsqrt(layer['rvar'] + BN_EPS)
                w = layer['w'] * s[None, None, :]
                b = layer['beta'] - layer['rmean'] * s
                c0 = h * head_channels
            else:           # final conv with a real bias
                w = layer['w']
                b = layer['b']
                c0 = out_off[h]
            c1 = c0 + int(w.shape[2])
            r0 = 0 if li == 0 else h * head_channels   # shared x vs head-private
            r1 = r0 + int(w.shape[1])
            W = W.at[:, r0:r1, c0:c1].set(w)
            bvec = bvec.at[c0:c1].set(b)
        weights.append(W.astype(jnp.bfloat16))          # MXU-native operand dtype
        biases.append(bvec.reshape(1, cout_l).astype(jnp.float32))
        relu_flags.append(is_hidden)
        layer_couts.append(cout_l)
    return (weights, biases, tuple(relu_flags), tuple(layer_couts),
            int(cact), int(cout_pad))


def make_forward(head_specs, kernel_size, relu_flags, layer_couts, cact):
    """head_specs: tuple of (name, out_channels) in head order (static)."""
    def forward(weights, biases, x_ncl):
        B, C0, L = x_ncl.shape
        x_nlc = jnp.transpose(x_ncl, (0, 2, 1))                # NCL -> NLC once
        if cact > C0:                                          # lane-pad channels
            x_nlc = jnp.pad(x_nlc, ((0, 0), (0, 0), (0, cact - C0)))
        y_nlc = fused_stack_pallas(x_nlc, weights, biases, K=kernel_size,
                                   relu_flags=relu_flags, layer_couts=layer_couts,
                                   cact=cact)
        # TODO(synk): when L >= 128, emit the (B, Cout, L) layout directly inside
        # the kernel (idle XLU) and drop this transpose; skipped since L < 128.
        y_ncl = jnp.transpose(y_nlc, (0, 2, 1))
        ret, off = {}, 0
        for name, c in head_specs:
            ret[name] = y_ncl[:, off:off + c, :]               # static slices
            off += c
        return ret
    return forward


# ----------------------------------------------------------------------------
# Pure-JAX reference (PyTorch semantics: NCL conv, explicit eval BN, ReLU).
# ----------------------------------------------------------------------------
def _ref_conv1d(x_ncl, w_kio, bias):
    w_oik = jnp.transpose(w_kio, (2, 1, 0))
    K = w_kio.shape[0]
    pad = K // 2
    y = lax.conv_general_dilated(
        x_ncl, w_oik, window_strides=(1,), padding=[(pad, pad)],
        dimension_numbers=('NCH', 'OIH', 'NCH'),
        precision=lax.Precision.HIGHEST)
    return y + bias[None, :, None]


def reference_forward(params, x_ncl):
    ret = {}
    for name, layers in params.items():
        h = x_ncl
        for layer in layers:
            if 'gamma' in layer:
                h = _ref_conv1d(h, layer['w'], jnp.zeros(layer['w'].shape[-1]))
                s = layer['gamma'] * lax.rsqrt(layer['rvar'] + BN_EPS)
                h = (h - layer['rmean'][None, :, None]) * s[None, :, None] \
                    + layer['beta'][None, :, None]
                h = jnp.maximum(h, 0.0)
            else:
                h = _ref_conv1d(h, layer['w'], layer['b'])
        ret[name] = h
    return ret


if __name__ == "__main__":
    # Small synthetic config consistent with the module.
    input_channels = 32
    head_channels = 32
    kernel_size = 3            # odd -> Lout == L, as in the real config
    B, L = 2, 16
    sep_head_dict = {
        'center': {'out_channels': 2, 'num_conv': 2},
        'dim':    {'out_channels': 3, 'num_conv': 2},
        'hm':     {'out_channels': 4, 'num_conv': 2},
    }

    key = jax.random.PRNGKey(0)
    kp, kx = jax.random.split(key)
    params = build_params(kp, input_channels, head_channels, kernel_size,
                          sep_head_dict)
    x = jax.random.normal(kx, (B, input_channels, L), jnp.float32)  # NCL like torch

    head_names = tuple(sep_head_dict.keys())
    head_specs = tuple((n, sep_head_dict[n]['out_channels']) for n in head_names)

    # Fold/fuse/lane-pad parameters once (arrays only -> jit-friendly pytree).
    (weights, biases, relu_flags, layer_couts,
     cact, cout_pad) = fuse_head_params(params, head_names, kernel_size,
                                        input_channels, head_channels)

    fwd = jax.jit(make_forward(head_specs, kernel_size, relu_flags,
                               layer_couts, cact))
    out = fwd(weights, biases, x)
    out = jax.block_until_ready(out)

    ref = reference_forward(params, x)
    for name, c in head_specs:
        assert out[name].shape == (B, c, L), (name, out[name].shape)
        # bf16 MXU operands with f32 accumulation -> bf16-level tolerance.
        assert jnp.allclose(out[name], ref[name], rtol=1e-2, atol=1e-2), name

    print("KERNEL_OK")
</pallas_src>

<mosaic_0001>
module attributes {stable_mosaic.version = 11 : i64} {
  func.func @_fused_stack_kernel(%arg0: i32, %arg1: memref<2x16x128xf32, #tpu.memory_space<vmem>>, %arg2: memref<3x128x128xbf16, #tpu.memory_space<vmem>>, %arg3: memref<1x128xf32, #tpu.memory_space<vmem>>, %arg4: memref<3x128x128xbf16, #tpu.memory_space<vmem>>, %arg5: memref<1x128xf32, #tpu.memory_space<vmem>>, %arg6: memref<2x16x128xf32, #tpu.memory_space<vmem>>, %arg7: memref<2x18x128xf32, #tpu.memory_space<vmem>>) attributes {dimension_semantics = [#tpu.dimension_semantics<parallel>], iteration_bounds = array<i64: 1>, scalar_prefetch = 0 : i64, scratch_operands = 1 : i64, tpu.core_type = #tpu.core_type<tc>, window_params = [{transform_indices = @transform_0, window_bounds = array<i64: 2, 16, 128>}, {pipeline_mode = #tpu.pipeline_mode<synchronous>, transform_indices = @transform_1, window_bounds = array<i64: 3, 128, 128>}, {pipeline_mode = #tpu.pipeline_mode<synchronous>, transform_indices = @transform_2, window_bounds = array<i64: 1, 128>}, {pipeline_mode = #tpu.pipeline_mode<synchronous>, transform_indices = @transform_3, window_bounds = array<i64: 3, 128, 128>}, {pipeline_mode = #tpu.pipeline_mode<synchronous>, transform_indices = @transform_4, window_bounds = array<i64: 1, 128>}, {transform_indices = @transform_5, window_bounds = array<i64: 2, 16, 128>}]} {
    %cst = arith.constant 0.000000e+00 : f32
    %0 = vector.broadcast %cst : f32 to vector<2x1x128xf32>
    %c0 = arith.constant 0 : index
    %c0_0 = arith.constant 0 : index
    %c0_1 = arith.constant 0 : index
    %1 = vector.load %arg7[%c0, %c0_0, %c0_1] : memref<2x18x128xf32, #tpu.memory_space<vmem>>, vector<2x1x128xf32>
    tpu.vector_store %arg7[%c0, %c0_0, %c0_1], %0 {strides = array<i32>} : memref<2x18x128xf32, #tpu.memory_space<vmem>>, vector<2x1x128xf32>,
    %c0_2 = arith.constant 0 : index
    %c17 = arith.constant 17 : index
    %c0_3 = arith.constant 0 : index
    %2 = vector.load %arg7[%c0_2, %c17, %c0_3] : memref<2x18x128xf32, #tpu.memory_space<vmem>>, vector<2x1x128xf32>
    tpu.vector_store %arg7[%c0_2, %c17, %c0_3], %0 {strides = array<i32>} : memref<2x18x128xf32, #tpu.memory_space<vmem>>, vector<2x1x128xf32>,
    %c0_4 = arith.constant 0 : index
    %c0_5 = arith.constant 0 : index
    %c0_6 = arith.constant 0 : index
    %3 = vector.load %arg1[%c0_4, %c0_5, %c0_6] : memref<2x16x128xf32, #tpu.memory_space<vmem>>, vector<2x16x128xf32>
    %c0_7 = arith.constant 0 : index
    %c1 = arith.constant 1 : index
    %c0_8 = arith.constant 0 : index
    %4 = vector.load %arg7[%c0_7, %c1, %c0_8] : memref<2x18x128xf32, #tpu.memory_space<vmem>>, vector<2x16x128xf32>
    tpu.vector_store %arg7[%c0_7, %c1, %c0_8], %3 {strides = array<i32>} : memref<2x18x128xf32, #tpu.memory_space<vmem>>, vector<2x16x128xf32>,
    %cst_9 = arith.constant 0.000000e+00 : f32
    %5 = vector.broadcast %cst_9 : f32 to vector<32x128xf32>
    %c0_10 = arith.constant 0 : index
    %c0_11 = arith.constant 0 : index
    %c0_12 = arith.constant 0 : index
    %6 = vector.load %arg7[%c0_10, %c0_11, %c0_12] : memref<2x18x128xf32, #tpu.memory_space<vmem>>, vector<2x16x128xf32>
    %7 = vector.shape_cast %6 : vector<2x16x128xf32> to vector<32x128xf32>
    %8 = arith.truncf %7 : vector<32x128xf32> to vector<32x128xbf16>
    %c0_13 = arith.constant 0 : index
    %c0_14 = arith.constant 0 : index
    %c0_15 = arith.constant 0 : index
    %9 = vector.load %arg2[%c0_13, %c0_14, %c0_15] : memref<3x128x128xbf16, #tpu.memory_space<vmem>>, vector<1x128x128xbf16>
    %10 = vector.shape_cast %9 : vector<1x128x128xbf16> to vector<128x128xbf16>
    %cst_16 = arith.constant dense<0.000000e+00> : vector<32x128xf32>
    %11 = tpu.matmul %8, %10, %cst_16 {dimension_numbers = #tpu.dot_dimension_numbers<[1], [0], [0], [1], [0, 0, 1, 1], [], []>} : vector<32x128xbf16>, vector<128x128xbf16>, vector<32x128xf32> -> vector<32x128xf32>
    %12 = arith.addf %5, %11 : vector<32x128xf32>
    %c0_17 = arith.constant 0 : index
    %c1_18 = arith.constant 1 : index
    %c0_19 = arith.constant 0 : index
    %13 = vector.load %arg7[%c0_17, %c1_18, %c0_19] : memref<2x18x128xf32, #tpu.memory_space<vmem>>, vector<2x16x128xf32>
    %14 = vector.shape_cast %13 : vector<2x16x128xf32> to vector<32x128xf32>
    %15 = arith.truncf %14 : vector<32x128xf32> to vector<32x128xbf16>
    %c1_20 = arith.constant 1 : index
    %c0_21 = arith.constant 0 : index
    %c0_22 = arith.constant 0 : index
    %16 = vector.load %arg2[%c1_20, %c0_21, %c0_22] : memref<3x128x128xbf16, #tpu.memory_space<vmem>>, vector<1x128x128xbf16>
    %17 = vector.shape_cast %16 : vector<1x128x128xbf16> to vector<128x128xbf16>
    %cst_23 = arith.constant dense<0.000000e+00> : vector<32x128xf32>
    %18 = tpu.matmul %15, %17, %cst_23 {dimension_numbers = #tpu.dot_dimension_numbers<[1], [0], [0], [1], [0, 0, 1, 1], [], []>} : vector<32x128xbf16>, vector<128x128xbf16>, vector<32x128xf32> -> vector<32x128xf32>
    %19 = arith.addf %12, %18 : vector<32x128xf32>
    %c0_24 = arith.constant 0 : index
    %c2 = arith.constant 2 : index
    %c0_25 = arith.constant 0 : index
    %20 = vector.load %arg7[%c0_24, %c2, %c0_25] : memref<2x18x128xf32, #tpu.memory_space<vmem>>, vector<2x16x128xf32>
    %21 = vector.shape_cast %20 : vector<2x16x128xf32> to vector<32x128xf32>
    %22 = arith.truncf %21 : vector<32x128xf32> to vector<32x128xbf16>
    %c2_26 = arith.constant 2 : index
    %c0_27 = arith.constant 0 : index
    %c0_28 = arith.constant 0 : index
    %23 = vector.load %arg2[%c2_26, %c0_27, %c0_28] : memref<3x128x128xbf16, #tpu.memory_space<vmem>>, vector<1x128x128xbf16>
    %24 = vector.shape_cast %23 : vector<1x128x128xbf16> to vector<128x128xbf16>
    %cst_29 = arith.constant dense<0.000000e+00> : vector<32x128xf32>
    %25 = tpu.matmul %22, %24, %cst_29 {dimension_numbers = #tpu.dot_dimension_numbers<[1], [0], [0], [1], [0, 0, 1, 1], [], []>} : vector<32x128xbf16>, vector<128x128xbf16>, vector<32x128xf32> -> vector<32x128xf32>
    %26 = arith.addf %19, %25 : vector<32x128xf32>
    %c0_30 = arith.constant 0 : index
    %c0_31 = arith.constant 0 : index
    %27 = vector.load %arg3[%c0_30, %c0_31] : memref<1x128xf32, #tpu.memory_space<vmem>>, vector<1x128xf32>
    %28 = vector.broadcast %27 : vector<1x128xf32> to vector<32x128xf32>
    %29 = arith.addf %26, %28 : vector<32x128xf32>
    %cst_32 = arith.constant 0.000000e+00 : f32
    %30 = vector.broadcast %cst_32 : f32 to vector<32x128xf32>
    %31 = arith.maximumf %29, %30 : vector<32x128xf32>
    %32 = vector.shape_cast %31 : vector<32x128xf32> to vector<2x16x128xf32>
    %c0_33 = arith.constant 0 : index
    %c1_34 = arith.constant 1 : index
    %c0_35 = arith.constant 0 : index
    %33 = vector.load %arg7[%c0_33, %c1_34, %c0_35] : memref<2x18x128xf32, #tpu.memory_space<vmem>>, vector<2x16x128xf32>
    tpu.vector_store %arg7[%c0_33, %c1_34, %c0_35], %32 {strides = array<i32>} : memref<2x18x128xf32, #tpu.memory_space<vmem>>, vector<2x16x128xf32>,
    %cst_36 = arith.constant 0.000000e+00 : f32
    %34 = vector.broadcast %cst_36 : f32 to vector<32x128xf32>
    %c0_37 = arith.constant 0 : index
    %c0_38 = arith.constant 0 : index
    %c0_39 = arith.constant 0 : index
    %35 = vector.load %arg7[%c0_37, %c0_38, %c0_39] : memref<2x18x128xf32, #tpu.memory_space<vmem>>, vector<2x16x128xf32>
    %36 = vector.shape_cast %35 : vector<2x16x128xf32> to vector<32x128xf32>
    %37 = arith.truncf %36 : vector<32x128xf32> to vector<32x128xbf16>
    %c0_40 = arith.constant 0 : index
    %c0_41 = arith.constant 0 : index
    %c0_42 = arith.constant 0 : index
    %38 = vector.load %arg4[%c0_40, %c0_41, %c0_42] : memref<3x128x128xbf16, #tpu.memory_space<vmem>>, vector<1x128x128xbf16>
    %39 = vector.shape_cast %38 : vector<1x128x128xbf16> to vector<128x128xbf16>
    %cst_43 = arith.constant dense<0.000000e+00> : vector<32x128xf32>
    %40 = tpu.matmul %37, %39, %cst_43 {dimension_numbers = #tpu.dot_dimension_numbers<[1], [0], [0], [1], [0, 0, 1, 1], [], []>} : vector<32x128xbf16>, vector<128x128xbf16>, vector<32x128xf32> -> vector<32x128xf32>
    %41 = arith.addf %34, %40 : vector<32x128xf32>
    %c0_44 = arith.constant 0 : index
    %c1_45 = arith.constant 1 : index
    %c0_46 = arith.constant 0 : index
    %42 = vector.load %arg7[%c0_44, %c1_45, %c0_46] : memref<2x18x128xf32, #tpu.memory_space<vmem>>, vector<2x16x128xf32>
    %43 = vector.shape_cast %42 : vector<2x16x128xf32> to vector<32x128xf32>
    %44 = arith.truncf %43 : vector<32x128xf32> to vector<32x128xbf16>
    %c1_47 = arith.constant 1 : index
    %c0_48 = arith.constant 0 : index
    %c0_49 = arith.constant 0 : index
    %45 = vector.load %arg4[%c1_47, %c0_48, %c0_49] : memref<3x128x128xbf16, #tpu.memory_space<vmem>>, vector<1x128x128xbf16>
    %46 = vector.shape_cast %45 : vector<1x128x128xbf16> to vector<128x128xbf16>
    %cst_50 = arith.constant dense<0.000000e+00> : vector<32x128xf32>
    %47 = tpu.matmul %44, %46, %cst_50 {dimension_numbers = #tpu.dot_dimension_numbers<[1], [0], [0], [1], [0, 0, 1, 1], [], []>} : vector<32x128xbf16>, vector<128x128xbf16>, vector<32x128xf32> -> vector<32x128xf32>
    %48 = arith.addf %41, %47 : vector<32x128xf32>
    %c0_51 = arith.constant 0 : index
    %c2_52 = arith.constant 2 : index
    %c0_53 = arith.constant 0 : index
    %49 = vector.load %arg7[%c0_51, %c2_52, %c0_53] : memref<2x18x128xf32, #tpu.memory_space<vmem>>, vector<2x16x128xf32>
    %50 = vector.shape_cast %49 : vector<2x16x128xf32> to vector<32x128xf32>
    %51 = arith.truncf %50 : vector<32x128xf32> to vector<32x128xbf16>
    %c2_54 = arith.constant 2 : index
    %c0_55 = arith.constant 0 : index
    %c0_56 = arith.constant 0 : index
    %52 = vector.load %arg4[%c2_54, %c0_55, %c0_56] : memref<3x128x128xbf16, #tpu.memory_space<vmem>>, vector<1x128x128xbf16>
    %53 = vector.shape_cast %52 : vector<1x128x128xbf16> to vector<128x128xbf16>
    %cst_57 = arith.constant dense<0.000000e+00> : vector<32x128xf32>
    %54 = tpu.matmul %51, %53, %cst_57 {dimension_numbers = #tpu.dot_dimension_numbers<[1], [0], [0], [1], [0, 0, 1, 1], [], []>} : vector<32x128xbf16>, vector<128x128xbf16>, vector<32x128xf32> -> vector<32x128xf32>
    %55 = arith.addf %48, %54 : vector<32x128xf32>
    %c0_58 = arith.constant 0 : index
    %c0_59 = arith.constant 0 : index
    %56 = vector.load %arg5[%c0_58, %c0_59] : memref<1x128xf32, #tpu.memory_space<vmem>>, vector<1x128xf32>
    %57 = vector.broadcast %56 : vector<1x128xf32> to vector<32x128xf32>
    %58 = arith.addf %55, %57 : vector<32x128xf32>
    %59 = vector.shape_cast %58 : vector<32x128xf32> to vector<2x16x128xf32>
    %c0_60 = arith.constant 0 : index
    %c0_61 = arith.constant 0 : index
    %c0_62 = arith.constant 0 : index
    %60 = vector.load %arg6[%c0_60, %c0_61, %c0_62] : memref<2x16x128xf32, #tpu.memory_space<vmem>>, vector<2x16x128xf32>
    tpu.vector_store %arg6[%c0_60, %c0_61, %c0_62], %59 {strides = array<i32>} : memref<2x16x128xf32, #tpu.memory_space<vmem>>, vector<2x16x128xf32>,
    return
  }
  func.func @transform_0(%arg0: i32) -> (i32, i32, i32) {
    %c0_i32 = arith.constant 0 : i32
    %c0_i32_0 = arith.constant 0 : i32
    %c0_i32_1 = arith.constant 0 : i32
    return %arg0, %c0_i32, %c0_i32_0 : i32, i32, i32
  }
  func.func @transform_1(%arg0: i32) -> (i32, i32, i32) {
    %c0_i32 = arith.constant 0 : i32
    %c0_i32_0 = arith.constant 0 : i32
    %c0_i32_1 = arith.constant 0 : i32
    %c0_i32_2 = arith.constant 0 : i32
    return %c0_i32, %c0_i32_0, %c0_i32_1 : i32, i32, i32
  }
  func.func @transform_2(%arg0: i32) -> (i32, i32) {
    %c0_i32 = arith.constant 0 : i32
    %c0_i32_0 = arith.constant 0 : i32
    %c0_i32_1 = arith.constant 0 : i32
    return %c0_i32, %c0_i32_0 : i32, i32
  }
  func.func @transform_3(%arg0: i32) -> (i32, i32, i32) {
    %c0_i32 = arith.constant 0 : i32
    %c0_i32_0 = arith.constant 0 : i32
    %c0_i32_1 = arith.constant 0 : i32
    %c0_i32_2 = arith.constant 0 : i32
    return %c0_i32, %c0_i32_0, %c0_i32_1 : i32, i32, i32
  }
  func.func @transform_4(%arg0: i32) -> (i32, i32) {
    %c0_i32 = arith.constant 0 : i32
    %c0_i32_0 = arith.constant 0 : i32
    %c0_i32_1 = arith.constant 0 : i32
    return %c0_i32, %c0_i32_0 : i32, i32
  }
  func.func @transform_5(%arg0: i32) -> (i32, i32, i32) {
    %c0_i32 = arith.constant 0 : i32
    %c0_i32_0 = arith.constant 0 : i32
    %c0_i32_1 = arith.constant 0 : i32
    return %arg0, %c0_i32, %c0_i32_0 : i32, i32, i32
  }
}

</mosaic_0001>

<llo_original>
// kernel: forward.1
$region0: #{forward.1}
  #allocation0 [shape = 'u32[]', space=smem, size = 0x4, offset = 0x4, fixed_abs, tag = 'smem constant byte address 0x4 - core index']
  #allocation1 [shape = 'u32[144,128]{1,0:T(1,128)}', space=vmem, size = 0x12000, scoped, tag = 'internal scratch']
  #allocation2 [shape = 'f32[2,18,128]{2,1,0:T(8,128)}', space=vmem, size = 0x6000, scoped, tag = 'scratch operand']
  %s0 = inlined_call_operand.vmem [shape: f32[2,16,128], index: 0, kind: input, shape index: {}]
  %s1 = inlined_call_operand.hbm [shape: bf16[3,128,128], index: 1, kind: input, shape index: {}]
  %s2 = inlined_call_operand.vmem [shape: f32[1,128], index: 2, kind: input, shape index: {}]
  %s3 = inlined_call_operand.hbm [shape: bf16[3,128,128], index: 3, kind: input, shape index: {}]
  %s4 = inlined_call_operand.vmem [shape: f32[1,128], index: 4, kind: input, shape index: {}]
  %s5 = inlined_call_operand.vmem [shape: f32[2,16,128], index: 5, kind: output, shape index: {}]
  %s6 = sld [smem:[#allocation0]]
  $region38: #{forward.1} parent=0
    _
  %s8 = ssub.s32 1, %s6
  %s9 = scalar_select 0, %s8, %s6
  $region1: #{forward.1} parent=0
    #allocation3 [shape = 'u8[98304]{0}', space=vmem, size = 0x18000, scoped, tag = 'input window, operand 1, single buffered']
    #allocation4 [shape = 's32[1]{0}', space=sflag, size = 0x4, scoped, tag = 'scoped memory for forward.1']
    #allocation5 [shape = 'u8[98304]{0}', space=vmem, size = 0x18000, scoped, tag = 'input window, operand 3, single buffered']
    #allocation6 [shape = 's32[1]{0}', space=sflag, size = 0x4, scoped, tag = 'scoped memory for forward.1']
    %10 = vsyncpa [#allocation4], 0
    %11 = vsyncpa [#allocation6], 0
    // Predicated region
    $region2: #{forward.1} parent=1 // pred_check
      _
    $region3: #{forward.1} parent=1 // pred_check_branch
      %13 = sbr.rel (0) target = $region5
    $region4: #{forward.1} parent=1 // pred_region
      _
    $region5: #{forward.1} parent=1 // pred_fallthru
      _
    // Predicated region
    $region6: #{forward.1} parent=1 // pred_check
      _
    $region7: #{forward.1} parent=1 // pred_check_branch
      %15 = sbr.rel (0) target = $region9
    $region8: #{forward.1} parent=1 // pred_region
      %s17 = ssub.s32 3072, 3072
      %18 = vsyncadd [#allocation4], %s17
      %s19 = sshll.u32 [#allocation3], 4
      %s20 = int_to_ptr.vmem [resolvable:$true] %s19
      %25 = dma.hbm_to_vmem [thread:$0]  %s1, 3072, %s20, [#allocation4], 64, 64, 4
    $region9: #{forward.1} parent=1 // pred_fallthru
      _
    // Predicated region
    $region10: #{forward.1} parent=1 // pred_check
      _
    $region11: #{forward.1} parent=1 // pred_check_branch
      %27 = sbr.rel (0) target = $region13
    $region12: #{forward.1} parent=1 // pred_region
      _
    $region13: #{forward.1} parent=1 // pred_fallthru
      _
    // Predicated region
    $region14: #{forward.1} parent=1 // pred_check
      _
    $region15: #{forward.1} parent=1 // pred_check_branch
      %29 = sbr.rel (0) target = $region17
    $region16: #{forward.1} parent=1 // pred_region
      %s31 = ssub.s32 3072, 3072
      %32 = vsyncadd [#allocation6], %s31
      %s33 = sshll.u32 [#allocation5], 4
      %s34 = int_to_ptr.vmem [resolvable:$true] %s33
      %39 = dma.hbm_to_vmem [thread:$0]  %s3, 3072, %s34, [#allocation6], 64, 64, 4
    $region17: #{forward.1} parent=1 // pred_fallthru
      _
    // Predicated region
    $region18: #{forward.1} parent=1 // pred_check
      _
    $region19: #{forward.1} parent=1 // pred_check_branch
      %41 = sbr.rel (0) target = $region21
    $region20: #{forward.1} parent=1 // pred_region
      _
    $region21: #{forward.1} parent=1 // pred_fallthru
      _
    // Predicated region
    $region22: #{forward.1} parent=1 // pred_check
      _
    $region23: #{forward.1} parent=1 // pred_check_branch
      %43 = sbr.rel (0) target = $region25
    $region24: #{forward.1} parent=1 // pred_region
      %44 = dma.done [#allocation4], 3072
    $region25: #{forward.1} parent=1 // pred_fallthru
      _
    // Predicated region
    $region26: #{forward.1} parent=1 // pred_check
      _
    $region27: #{forward.1} parent=1 // pred_check_branch
      %46 = sbr.rel (0) target = $region29
    $region28: #{forward.1} parent=1 // pred_region
      %47 = dma.done [#allocation6], 3072
    $region29: #{forward.1} parent=1 // pred_fallthru
      _
    %49 = vst [vmem:[#allocation2] sm:$0x1] 0.0
    %50 = vst [vmem:[#allocation2 + $0x18] sm:$0x1] 0.0
    %51 = vst [vmem:[#allocation2 + $0x11] sm:$0x1] 0.0
    %52 = vst [vmem:[#allocation2 + $0x29] sm:$0x1] 0.0
    %v53 = vld [vmem:[%s0] sm:$0xff]
    %v54 = vld [vmem:[%s0 + $0x8] sm:$0xff]
    %v55 = vld [vmem:[%s0 + $0x10] sm:$0xff]
    %v56 = vld [vmem:[%s0 + $0x18] sm:$0xff]
    %57 = vst [vmem:[#allocation2 + $0x1] sm:$0xff] %v53
    %58 = vst [vmem:[#allocation2 + $0x9] sm:$0xff] %v54
    %59 = vst [vmem:[#allocation2 + $0x19] sm:$0xff] %v55
    %60 = vst [vmem:[#allocation2 + $0x21] sm:$0xff] %v56
    %v61 = vld [vmem:[#allocation2] sm:$0xff]
    %v62 = vld [vmem:[#allocation2 + $0x8] sm:$0xff]
    %v63 = vld [vmem:[#allocation2 + $0x18] sm:$0xff]
    %v64 = vld [vmem:[#allocation2 + $0x20] sm:$0xff]
    %v65 = vpack.c.bf16 %v62, %v61
    %v66 = vpack.c.bf16 %v64, %v63
    %v67 = vld [vmem:[#allocation3] sm:$0xf]
    %v68 = vld [vmem:[#allocation3 + $0x4] sm:$0xf]
    %v69 = vld [vmem:[#allocation3 + $0x8] sm:$0xf]
    %v70 = vld [vmem:[#allocation3 + $0xc] sm:$0xf]
    %v71 = vld [vmem:[#allocation3 + $0x10] sm:$0xf]
    %v72 = vld [vmem:[#allocation3 + $0x14] sm:$0xf]
    %v73 = vld [vmem:[#allocation3 + $0x18] sm:$0xf]
    %v74 = vld [vmem:[#allocation3 + $0x1c] sm:$0xf]
    %v75 = vld [vmem:[#allocation3 + $0x20] sm:$0xf]
    %v76 = vld [vmem:[#allocation3 + $0x24] sm:$0xf]
    %v77 = vld [vmem:[#allocation3 + $0x28] sm:$0xf]
    %v78 = vld [vmem:[#allocation3 + $0x2c] sm:$0xf]
    %v79 = vld [vmem:[#allocation3 + $0x30] sm:$0xf]
    %v80 = vld [vmem:[#allocation3 + $0x34] sm:$0xf]
    %v81 = vld [vmem:[#allocation3 + $0x38] sm:$0xf]
    %v82 = vld [vmem:[#allocation3 + $0x3c] sm:$0xf]
    %v83 = vld [vmem:[#allocation2 + $0x1] sm:$0xff]
    %v84 = vld [vmem:[#allocation2 + $0x9] sm:$0xff]
    %v85 = vld [vmem:[#allocation2 + $0x19] sm:$0xff]
    %v86 = vld [vmem:[#allocation2 + $0x21] sm:$0xff]
    %v87 = vpack.c.bf16 %v84, %v83
    %v88 = vpack.c.bf16 %v86, %v85
    %s89 = scalar_lea.vmem [#allocation3], 64
    %v90 = vld [vmem:[%s89] sm:$0xf]
    %v91 = vld [vmem:[%s89 + $0x4] sm:$0xf]
    %v92 = vld [vmem:[%s89 + $0x8] sm:$0xf]
    %v93 = vld [vmem:[%s89 + $0xc] sm:$0xf]
    %v94 = vld [vmem:[%s89 + $0x10] sm:$0xf]
    %v95 = vld [vmem:[%s89 + $0x14] sm:$0xf]
    %v96 = vld [vmem:[%s89 + $0x18] sm:$0xf]
    %v97 = vld [vmem:[%s89 + $0x1c] sm:$0xf]
    %v98 = vld [vmem:[%s89 + $0x20] sm:$0xf]
    %v99 = vld [vmem:[%s89 + $0x24] sm:$0xf]
    %v100 = vld [vmem:[%s89 + $0x28] sm:$0xf]
    %v101 = vld [vmem:[%s89 + $0x2c] sm:$0xf]
    %v102 = vld [vmem:[%s89 + $0x30] sm:$0xf]
    %v103 = vld [vmem:[%s89 + $0x34] sm:$0xf]
    %v104 = vld [vmem:[%s89 + $0x38] sm:$0xf]
    %v105 = vld [vmem:[%s89 + $0x3c] sm:$0xf]
    %v122 = vunpack.c.l.b16 %v90
    %v123 = vunpack.c.l.b16 %v91
    %v124 = vunpack.c.l.b16 %v92
    %v125 = vunpack.c.l.b16 %v93
    %v126 = vunpack.c.l.b16 %v94
    %v127 = vunpack.c.l.b16 %v95
    %v128 = vunpack.c.l.b16 %v96
    %v129 = vunpack.c.l.b16 %v97
    %v130 = vunpack.c.l.b16 %v98
    %v131 = vunpack.c.l.b16 %v99
    %v132 = vunpack.c.l.b16 %v100
    %v133 = vunpack.c.l.b16 %v101
    %v134 = vunpack.c.l.b16 %v102
    %v135 = vunpack.c.l.b16 %v103
    %v136 = vunpack.c.l.b16 %v104
    %v137 = vunpack.c.l.b16 %v105
    %v138 = vpack.c.b16 %v123, %v122
    %v139 = vpack.c.b16 %v125, %v124
    %v140 = vpack.c.b16 %v127, %v126
    %v141 = vpack.c.b16 %v129, %v128
    %v142 = vpack.c.b16 %v131, %v130
    %v143 = vpack.c.b16 %v133, %v132
    %v144 = vpack.c.b16 %v135, %v134
    %v145 = vpack.c.b16 %v137, %v136
    %154 = vmatprep.subr.bf16.mxu0 0
    %155 = vmatpush1.bf16.msra.mxu0 %v138
    %156 = vmatprep.subr.bf16.mxu0 0
    %157 = vmatpush1.bf16.msra.mxu0 %v139
    %158 = vmatprep.subr.bf16.mxu0 0
    %159 = vmatpush1.bf16.msra.mxu0 %v140
    %160 = vmatprep.subr.bf16.mxu0 0
    %161 = vmatpush1.bf16.msra.mxu0 %v141
    %162 = vmatprep.subr.bf16.mxu0 0
    %163 = vmatpush1.bf16.msra.mxu0 %v142
    %164 = vmatprep.subr.bf16.mxu0 0
    %165 = vmatpush1.bf16.msra.mxu0 %v143
    %166 = vmatprep.subr.bf16.mxu0 0
    %167 = vmatpush1.bf16.msra.mxu0 %v144
    %168 = vmatprep.subr.bf16.mxu0 0
    %169 = vmatpush1.bf16.msra.mxu0 %v145
    %170 = vmatprep.subr.bf16.mxu0 0
    %171 = vmatpush1.bf16.msra.mxu0 0
    %172 = vmatprep.subr.bf16.mxu0 0
    %173 = vmatpush1.bf16.msra.mxu0 0
    %174 = vmatprep.subr.bf16.mxu0 0
    %175 = vmatpush1.bf16.msra.mxu0 0
    %176 = vmatprep.subr.bf16.mxu0 0
    %177 = vmatpush1.bf16.msra.mxu0 0
    %178 = vmatprep.subr.bf16.mxu0 0
    %179 = vmatpush1.bf16.msra.mxu0 0
    %180 = vmatprep.subr.bf16.mxu0 0
    %181 = vmatpush1.bf16.msra.mxu0 0
    %182 = vmatprep.subr.bf16.mxu0 0
    %183 = vmatpush1.bf16.msra.mxu0 0
    %184 = vmatprep.subr.bf16.mxu0 0
    %185 = vmatpush1.bf16.msra.mxu0 0
    %186 = vmatprep.mubr.bf16.mxu0 0
    %187 = vmatmul.mubr.bf16.gmra.mrb[0].mxu0 %v87
    %v188 = vpop.f32.mrb[0].mxu0
    %v189 = vadd.f32 0.0, %v188
    %v190 = vpop.f32.mrb[0].mxu0
    %v191 = vpop.f32.mrb[0].mxu0
    %v192 = vadd.f32 0.0, %v191
    %v193 = vpop.f32.mrb[0].mxu0
    %194 = vmatprep.mubr.bf16.mxu0 0
    %195 = vmatmul.mubr.bf16.gmra.mrb[0].mxu0 %v88
    %v196 = vpop.f32.mrb[0].mxu0
    %v197 = vadd.f32 0.0, %v196
    %v198 = vpop.f32.mrb[0].mxu0
    %v199 = vpop.f32.mrb[0].mxu0
    %v200 = vadd.f32 0.0, %v199
    %v201 = vpop.f32.mrb[0].mxu0
    %202 = vdwg.mxu0
    %v219 = vunpack.c.l.b16 %v67
    %v220 = vunpack.c.l.b16 %v68
    %v221 = vunpack.c.l.b16 %v69
    %v222 = vunpack.c.l.b16 %v70
    %v223 = vunpack.c.l.b16 %v71
    %v224 = vunpack.c.l.b16 %v72
    %v225 = vunpack.c.l.b16 %v73
    %v226 = vunpack.c.l.b16 %v74
    %v227 = vunpack.c.l.b16 %v75
    %v228 = vunpack.c.l.b16 %v76
    %v229 = vunpack.c.l.b16 %v77
    %v230 = vunpack.c.l.b16 %v78
    %v231 = vunpack.c.l.b16 %v79
    %v232 = vunpack.c.l.b16 %v80
    %v233 = vunpack.c.l.b16 %v81
    %v234 = vunpack.c.l.b16 %v82
    %v235 = vpack.c.b16 %v220, %v219
    %v236 = vpack.c.b16 %v222, %v221
    %v237 = vpack.c.b16 %v224, %v223
    %v238 = vpack.c.b16 %v226, %v225
    %v239 = vpack.c.b16 %v228, %v227
    %v240 = vpack.c.b16 %v230, %v229
    %v241 = vpack.c.b16 %v232, %v231
    %v242 = vpack.c.b16 %v234, %v233
    %251 = vmatprep.subr.bf16.mxu0 0
    %252 = vmatpush1.bf16.msra.mxu0 %v235
    %253 = vmatprep.subr.bf16.mxu0 0
    %254 = vmatpush1.bf16.msra.mxu0 %v236
    %255 = vmatprep.subr.bf16.mxu0 0
    %256 = vmatpush1.bf16.msra.mxu0 %v237
    %257 = vmatprep.subr.bf16.mxu0 0
    %258 = vmatpush1.bf16.msra.mxu0 %v238
    %259 = vmatprep.subr.bf16.mxu0 0
    %260 = vmatpush1.bf16.msra.mxu0 %v239
    %261 = vmatprep.subr.bf16.mxu0 0
    %262 = vmatpush1.bf16.msra.mxu0 %v240
    %263 = vmatprep.subr.bf16.mxu0 0
    %264 = vmatpush1.bf16.msra.mxu0 %v241
    %265 = vmatprep.subr.bf16.mxu0 0
    %266 = vmatpush1.bf16.msra.mxu0 %v242
    %267 = vmatprep.subr.bf16.mxu0 0
    %268 = vmatpush1.bf16.msra.mxu0 0
    %269 = vmatprep.subr.bf16.mxu0 0
    %270 = vmatpush1.bf16.msra.mxu0 0
    %271 = vmatprep.subr.bf16.mxu0 0
    %272 = vmatpush1.bf16.msra.mxu0 0
    %273 = vmatprep.subr.bf16.mxu0 0
    %274 = vmatpush1.bf16.msra.mxu0 0
    %275 = vmatprep.subr.bf16.mxu0 0
    %276 = vmatpush1.bf16.msra.mxu0 0
    %277 = vmatprep.subr.bf16.mxu0 0
    %278 = vmatpush1.bf16.msra.mxu0 0
    %279 = vmatprep.subr.bf16.mxu0 0
    %280 = vmatpush1.bf16.msra.mxu0 0
    %281 = vmatprep.subr.bf16.mxu0 0
    %282 = vmatpush1.bf16.msra.mxu0 0
    %283 = vmatprep.mubr.bf16.mxu0 0
    %284 = vmatmul.mubr.bf16.gmra.mrb[0].mxu0 %v65
    %v285 = vpop.f32.mrb[0].mxu0
    %v286 = vadd.f32 %v189, %v285
    %v287 = vpop.f32.mrb[0].mxu0
    %v288 = vpop.f32.mrb[0].mxu0
    %v289 = vadd.f32 %v192, %v288
    %v290 = vpop.f32.mrb[0].mxu0
    %291 = vmatprep.mubr.bf16.mxu0 0
    %292 = vmatmul.mubr.bf16.gmra.mrb[0].mxu0 %v66
    %v293 = vpop.f32.mrb[0].mxu0
    %v294 = vadd.f32 %v197, %v293
    %v295 = vpop.f32.mrb[0].mxu0
    %v296 = vpop.f32.mrb[0].mxu0
    %v297 = vadd.f32 %v200, %v296
    %v298 = vpop.f32.mrb[0].mxu0
    %299 = vdwg.mxu0
    %v300 = vld [vmem:[#allocation2 + $0x2] sm:$0xff]
    %v301 = vld [vmem:[#allocation2 + $0xa] sm:$0xff]
    %v302 = vld [vmem:[#allocation2 + $0x1a] sm:$0xff]
    %v303 = vld [vmem:[#allocation2 + $0x22] sm:$0xff]
    %v304 = vpack.c.bf16 %v301, %v300
    %v305 = vpack.c.bf16 %v303, %v302
    %s306 = scalar_lea.vmem [#allocation3], 128
    %v307 = vld [vmem:[%s306] sm:$0xf]
    %v308 = vld [vmem:[%s306 + $0x4] sm:$0xf]
    %v309 = vld [vmem:[%s306 + $0x8] sm:$0xf]
    %v310 = vld [vmem:[%s306 + $0xc] sm:$0xf]
    %v311 = vld [vmem:[%s306 + $0x10] sm:$0xf]
    %v312 = vld [vmem:[%s306 + $0x14] sm:$0xf]
    %v313 = vld [vmem:[%s306 + $0x18] sm:$0xf]
    %v314 = vld [vmem:[%s306 + $0x1c] sm:$0xf]
    %v315 = vld [vmem:[%s306 + $0x20] sm:$0xf]
    %v316 = vld [vmem:[%s306 + $0x24] sm:$0xf]
    %v317 = vld [vmem:[%s306 + $0x28] sm:$0xf]
    %v318 = vld [vmem:[%s306 + $0x2c] sm:$0xf]
    %v319 = vld [vmem:[%s306 + $0x30] sm:$0xf]
    %v320 = vld [vmem:[%s306 + $0x34] sm:$0xf]
    %v321 = vld [vmem:[%s306 + $0x38] sm:$0xf]
    %v322 = vld [vmem:[%s306 + $0x3c] sm:$0xf]
    %v339 = vunpack.c.l.b16 %v307
    %v340 = vunpack.c.l.b16 %v308
    %v341 = vunpack.c.l.b16 %v309
    %v342 = vunpack.c.l.b16 %v310
    %v343 = vunpack.c.l.b16 %v311
    %v344 = vunpack.c.l.b16 %v312
    %v345 = vunpack.c.l.b16 %v313
    %v346 = vunpack.c.l.b16 %v314
    %v347 = vunpack.c.l.b16 %v315
    %v348 = vunpack.c.l.b16 %v316
    %v349 = vunpack.c.l.b16 %v317
    %v350 = vunpack.c.l.b16 %v318
    %v351 = vunpack.c.l.b16 %v319
    %v352 = vunpack.c.l.b16 %v320
    %v353 = vunpack.c.l.b16 %v321
    %v354 = vunpack.c.l.b16 %v322
    %v355 = vpack.c.b16 %v340, %v339
    %v356 = vpack.c.b16 %v342, %v341
    %v357 = vpack.c.b16 %v344, %v343
    %v358 = vpack.c.b16 %v346, %v345
    %v359 = vpack.c.b16 %v348, %v347
    %v360 = vpack.c.b16 %v350, %v349
    %v361 = vpack.c.b16 %v352, %v351
    %v362 = vpack.c.b16 %v354, %v353
    %371 = vmatprep.subr.bf16.mxu0 0
    %372 = vmatpush1.bf16.msra.mxu0 %v355
    %373 = vmatprep.subr.bf16.mxu0 0
    %374 = vmatpush1.bf16.msra.mxu0 %v356
    %375 = vmatprep.subr.bf16.mxu0 0
    %376 = vmatpush1.bf16.msra.mxu0 %v357
    %377 = vmatprep.subr.bf16.mxu0 0
    %378 = vmatpush1.bf16.msra.mxu0 %v358
    %379 = vmatprep.subr.bf16.mxu0 0
    %380 = vmatpush1.bf16.msra.mxu0 %v359
    %381 = vmatprep.subr.bf16.mxu0 0
    %382 = vmatpush1.bf16.msra.mxu0 %v360
    %383 = vmatprep.subr.bf16.mxu0 0
    %384 = vmatpush1.bf16.msra.mxu0 %v361
    %385 = vmatprep.subr.bf16.mxu0 0
    %386 = vmatpush1.bf16.msra.mxu0 %v362
    %387 = vmatprep.subr.bf16.mxu0 0
    %388 = vmatpush1.bf16.msra.mxu0 0
    %389 = vmatprep.subr.bf16.mxu0 0
    %390 = vmatpush1.bf16.msra.mxu0 0
    %391 = vmatprep.subr.bf16.mxu0 0
    %392 = vmatpush1.bf16.msra.mxu0 0
    %393 = vmatprep.subr.bf16.mxu0 0
    %394 = vmatpush1.bf16.msra.mxu0 0
    %395 = vmatprep.subr.bf16.mxu0 0
    %396 = vmatpush1.bf16.msra.mxu0 0
    %397 = vmatprep.subr.bf16.mxu0 0
    %398 = vmatpush1.bf16.msra.mxu0 0
    %399 = vmatprep.subr.bf16.mxu0 0
    %400 = vmatpush1.bf16.msra.mxu0 0
    %401 = vmatprep.subr.bf16.mxu0 0
    %402 = vmatpush1.bf16.msra.mxu0 0
    %403 = vmatprep.mubr.bf16.mxu0 0
    %404 = vmatmul.mubr.bf16.gmra.mrb[0].mxu0 %v304
    %v405 = vpop.f32.mrb[0].mxu0
    %v406 = vadd.f32 0.0, %v405
    %v407 = vpop.f32.mrb[0].mxu0
    %v408 = vpop.f32.mrb[0].mxu0
    %v409 = vadd.f32 0.0, %v408
    %v410 = vpop.f32.mrb[0].mxu0
    %411 = vmatprep.mubr.bf16.mxu0 0
    %412 = vmatmul.mubr.bf16.gmra.mrb[0].mxu0 %v305
    %v413 = vpop.f32.mrb[0].mxu0
    %v414 = vadd.f32 0.0, %v413
    %v415 = vpop.f32.mrb[0].mxu0
    %v416 = vpop.f32.mrb[0].mxu0
    %v417 = vadd.f32 0.0, %v416
    %v418 = vpop.f32.mrb[0].mxu0
    %419 = vdwg.mxu0
    %v420 = vadd.f32 %v286, %v406
    %v421 = vadd.f32 %v289, %v409
    %v422 = vadd.f32 %v294, %v414
    %v423 = vadd.f32 %v297, %v417
    %v424 = vld [vmem:[%s2] sm:$0x1]
    %v426 = vlaneseq
    %v427 = vshrl.u32 %v426, 7
    %v428 = vsub.s32 0, %v427
    %v429 = vrot.slane %v424, %v428
    %v431 = vadd.f32 %v420, %v429
    %v432 = vadd.f32 %v421, %v429
    %v433 = vadd.f32 %v422, %v429
    %v434 = vadd.f32 %v423, %v429
    %v435 = vmax.f32 %v431, 0.0
    %v436 = vmax.f32 %v432, 0.0
    %v437 = vmax.f32 %v433, 0.0
    %v438 = vmax.f32 %v434, 0.0
    %439 = vst [vmem:[#allocation2 + $0x1] sm:$0xff] %v435
    %440 = vst [vmem:[#allocation2 + $0x9] sm:$0xff] %v436
    %441 = vst [vmem:[#allocation2 + $0x19] sm:$0xff] %v437
    %442 = vst [vmem:[#allocation2 + $0x21] sm:$0xff] %v438
    %v443 = vld [vmem:[#allocation2] sm:$0xff]
    %v444 = vld [vmem:[#allocation2 + $0x8] sm:$0xff]
    %v445 = vld [vmem:[#allocation2 + $0x18] sm:$0xff]
    %v446 = vld [vmem:[#allocation2 + $0x20] sm:$0xff]
    %v447 = vpack.c.bf16 %v444, %v443
    %v448 = vpack.c.bf16 %v446, %v445
    %v449 = vld [vmem:[#allocation5] sm:$0xf]
    %v450 = vld [vmem:[#allocation5 + $0x4] sm:$0xf]
    %v451 = vld [vmem:[#allocation5 + $0x8] sm:$0xf]
    %v452 = vld [vmem:[#allocation5 + $0xc] sm:$0xf]
    %v453 = vld [vmem:[#allocation5 + $0x10] sm:$0xf]
    %v454 = vld [vmem:[#allocation5 + $0x14] sm:$0xf]
    %v455 = vld [vmem:[#allocation5 + $0x18] sm:$0xf]
    %v456 = vld [vmem:[#allocation5 + $0x1c] sm:$0xf]
    %v457 = vld [vmem:[#allocation5 + $0x20] sm:$0xf]
    %v458 = vld [vmem:[#allocation5 + $0x24] sm:$0xf]
    %v459 = vld [vmem:[#allocation5 + $0x28] sm:$0xf]
    %v460 = vld [vmem:[#allocation5 + $0x2c] sm:$0xf]
    %v461 = vld [vmem:[#allocation5 + $0x30] sm:$0xf]
    %v462 = vld [vmem:[#allocation5 + $0x34] sm:$0xf]
    %v463 = vld [vmem:[#allocation5 + $0x38] sm:$0xf]
    %v464 = vld [vmem:[#allocation5 + $0x3c] sm:$0xf]
    %v465 = vld [vmem:[#allocation2 + $0x1] sm:$0xff]
    %v466 = vld [vmem:[#allocation2 + $0x9] sm:$0xff]
    %v467 = vld [vmem:[#allocation2 + $0x19] sm:$0xff]
    %v468 = vld [vmem:[#allocation2 + $0x21] sm:$0xff]
    %v469 = vpack.c.bf16 %v466, %v465
    %v470 = vpack.c.bf16 %v468, %v467
    %s471 = scalar_lea.vmem [#allocation5], 64
    %v472 = vld [vmem:[%s471] sm:$0xf]
    %v473 = vld [vmem:[%s471 + $0x4] sm:$0xf]
    %v474 = vld [vmem:[%s471 + $0x8] sm:$0xf]
    %v475 = vld [vmem:[%s471 + $0xc] sm:$0xf]
    %v476 = vld [vmem:[%s471 + $0x10] sm:$0xf]
    %v477 = vld [vmem:[%s471 + $0x14] sm:$0xf]
    %v478 = vld [vmem:[%s471 + $0x18] sm:$0xf]
    %v479 = vld [vmem:[%s471 + $0x1c] sm:$0xf]
    %v480 = vld [vmem:[%s471 + $0x20] sm:$0xf]
    %v481 = vld [vmem:[%s471 + $0x24] sm:$0xf]
    %v482 = vld [vmem:[%s471 + $0x28] sm:$0xf]
    %v483 = vld [vmem:[%s471 + $0x2c] sm:$0xf]
    %v484 = vld [vmem:[%s471 + $0x30] sm:$0xf]
    %v485 = vld [vmem:[%s471 + $0x34] sm:$0xf]
    %v486 = vld [vmem:[%s471 + $0x38] sm:$0xf]
    %v487 = vld [vmem:[%s471 + $0x3c] sm:$0xf]
    %v504 = vunpack.c.l.b16 %v472
    %v505 = vunpack.c.l.b16 %v473
    %v506 = vunpack.c.l.b16 %v474
    %v507 = vunpack.c.l.b16 %v475
    %v508 = vunpack.c.l.b16 %v476
    %v509 = vunpack.c.l.b16 %v477
    %v510 = vunpack.c.l.b16 %v478
    %v511 = vunpack.c.l.b16 %v479
    %v512 = vunpack.c.l.b16 %v480
    %v513 = vunpack.c.l.b16 %v481
    %v514 = vunpack.c.l.b16 %v482
    %v515 = vunpack.c.l.b16 %v483
    %v516 = vunpack.c.l.b16 %v484
    %v517 = vunpack.c.l.b16 %v485
    %v518 = vunpack.c.l.b16 %v486
    %v519 = vunpack.c.l.b16 %v487
    %v520 = vpack.c.b16 %v505, %v504
    %v521 = vpack.c.b16 %v507, %v506
    %v522 = vpack.c.b16 %v509, %v508
    %v523 = vpack.c.b16 %v511, %v510
    %v524 = vpack.c.b16 %v513, %v512
    %v525 = vpack.c.b16 %v515, %v514
    %v526 = vpack.c.b16 %v517, %v516
    %v527 = vpack.c.b16 %v519, %v518
    %536 = vmatprep.subr.bf16.mxu0 0
    %537 = vmatpush1.bf16.msra.mxu0 %v520
    %538 = vmatprep.subr.bf16.mxu0 0
    %539 = vmatpush1.bf16.msra.mxu0 %v521
    %540 = vmatprep.subr.bf16.mxu0 0
    %541 = vmatpush1.bf16.msra.mxu0 %v522
    %542 = vmatprep.subr.bf16.mxu0 0
    %543 = vmatpush1.bf16.msra.mxu0 %v523
    %544 = vmatprep.subr.bf16.mxu0 0
    %545 = vmatpush1.bf16.msra.mxu0 %v524
    %546 = vmatprep.subr.bf16.mxu0 0
    %547 = vmatpush1.bf16.msra.mxu0 %v525
    %548 = vmatprep.subr.bf16.mxu0 0
    %549 = vmatpush1.bf16.msra.mxu0 %v526
    %550 = vmatprep.subr.bf16.mxu0 0
    %551 = vmatpush1.bf16.msra.mxu0 %v527
    %552 = vmatprep.subr.bf16.mxu0 0
    %553 = vmatpush1.bf16.msra.mxu0 0
    %554 = vmatprep.subr.bf16.mxu0 0
    %555 = vmatpush1.bf16.msra.mxu0 0
    %556 = vmatprep.subr.bf16.mxu0 0
    %557 = vmatpush1.bf16.msra.mxu0 0
    %558 = vmatprep.subr.bf16.mxu0 0
    %559 = vmatpush1.bf16.msra.mxu0 0
    %560 = vmatprep.subr.bf16.mxu0 0
    %561 = vmatpush1.bf16.msra.mxu0 0
    %562 = vmatprep.subr.bf16.mxu0 0
    %563 = vmatpush1.bf16.msra.mxu0 0
    %564 = vmatprep.subr.bf16.mxu0 0
    %565 = vmatpush1.bf16.msra.mxu0 0
    %566 = vmatprep.subr.bf16.mxu0 0
    %567 = vmatpush1.bf16.msra.mxu0 0
    %568 = vmatprep.mubr.bf16.mxu0 0
    %569 = vmatmul.mubr.bf16.gmra.mrb[0].mxu0 %v469
    %v570 = vpop.f32.mrb[0].mxu0
    %v571 = vadd.f32 0.0, %v570
    %v572 = vpop.f32.mrb[0].mxu0
    %v573 = vpop.f32.mrb[0].mxu0
    %v574 = vadd.f32 0.0, %v573
    %v575 = vpop.f32.mrb[0].mxu0
    %576 = vmatprep.mubr.bf16.mxu0 0
    %577 = vmatmul.mubr.bf16.gmra.mrb[0].mxu0 %v470
    %v578 = vpop.f32.mrb[0].mxu0
    %v579 = vadd.f32 0.0, %v578
    %v580 = vpop.f32.mrb[0].mxu0
    %v581 = vpop.f32.mrb[0].mxu0
    %v582 = vadd.f32 0.0, %v581
    %v583 = vpop.f32.mrb[0].mxu0
    %584 = vdwg.mxu0
    %v601 = vunpack.c.l.b16 %v449
    %v602 = vunpack.c.l.b16 %v450
    %v603 = vunpack.c.l.b16 %v451
    %v604 = vunpack.c.l.b16 %v452
    %v605 = vunpack.c.l.b16 %v453
    %v606 = vunpack.c.l.b16 %v454
    %v607 = vunpack.c.l.b16 %v455
    %v608 = vunpack.c.l.b16 %v456
    %v609 = vunpack.c.l.b16 %v457
    %v610 = vunpack.c.l.b16 %v458
    %v611 = vunpack.c.l.b16 %v459
    %v612 = vunpack.c.l.b16 %v460
    %v613 = vunpack.c.l.b16 %v461
    %v614 = vunpack.c.l.b16 %v462
    %v615 = vunpack.c.l.b16 %v463
    %v616 = vunpack.c.l.b16 %v464
    %v617 = vpack.c.b16 %v602, %v601
    %v618 = vpack.c.b16 %v604, %v603
    %v619 = vpack.c.b16 %v606, %v605
    %v620 = vpack.c.b16 %v608, %v607
    %v621 = vpack.c.b16 %v610, %v609
    %v622 = vpack.c.b16 %v612, %v611
    %v623 = vpack.c.b16 %v614, %v613
    %v624 = vpack.c.b16 %v616, %v615
    %633 = vmatprep.subr.bf16.mxu0 0
    %634 = vmatpush1.bf16.msra.mxu0 %v617
    %635 = vmatprep.subr.bf16.mxu0 0
    %636 = vmatpush1.bf16.msra.mxu0 %v618
    %637 = vmatprep.subr.bf16.mxu0 0
    %638 = vmatpush1.bf16.msra.mxu0 %v619
    %639 = vmatprep.subr.bf16.mxu0 0
    %640 = vmatpush1.bf16.msra.mxu0 %v620
    %641 = vmatprep.subr.bf16.mxu0 0
    %642 = vmatpush1.bf16.msra.mxu0 %v621
    %643 = vmatprep.subr.bf16.mxu0 0
    %644 = vmatpush1.bf16.msra.mxu0 %v622
    %645 = vmatprep.subr.bf16.mxu0 0
    %646 = vmatpush1.bf16.msra.mxu0 %v623
    %647 = vmatprep.subr.bf16.mxu0 0
    %648 = vmatpush1.bf16.msra.mxu0 %v624
    %649 = vmatprep.subr.bf16.mxu0 0
    %650 = vmatpush1.bf16.msra.mxu0 0
    %651 = vmatprep.subr.bf16.mxu0 0
    %652 = vmatpush1.bf16.msra.mxu0 0
    %653 = vmatprep.subr.bf16.mxu0 0
    %654 = vmatpush1.bf16.msra.mxu0 0
    %655 = vmatprep.subr.bf16.mxu0 0
    %656 = vmatpush1.bf16.msra.mxu0 0
    %657 = vmatprep.subr.bf16.mxu0 0
    %658 = vmatpush1.bf16.msra.mxu0 0
    %659 = vmatprep.subr.bf16.mxu0 0
    %660 = vmatpush1.bf16.msra.mxu0 0
    %661 = vmatprep.subr.bf16.mxu0 0
    %662 = vmatpush1.bf16.msra.mxu0 0
    %663 = vmatprep.subr.bf16.mxu0 0
    %664 = vmatpush1.bf16.msra.mxu0 0
    %665 = vmatprep.mubr.bf16.mxu0 0
    %666 = vmatmul.mubr.bf16.gmra.mrb[0].mxu0 %v447
    %v667 = vpop.f32.mrb[0].mxu0
    %v668 = vadd.f32 %v571, %v667
    %v669 = vpop.f32.mrb[0].mxu0
    %v670 = vpop.f32.mrb[0].mxu0
    %v671 = vadd.f32 %v574, %v670
    %v672 = vpop.f32.mrb[0].mxu0
    %673 = vmatprep.mubr.bf16.mxu0 0
    %674 = vmatmul.mubr.bf16.gmra.mrb[0].mxu0 %v448
    %v675 = vpop.f32.mrb[0].mxu0
    %v676 = vadd.f32 %v579, %v675
    %v677 = vpop.f32.mrb[0].mxu0
    %v678 = vpop.f32.mrb[0].mxu0
    %v679 = vadd.f32 %v582, %v678
    %v680 = vpop.f32.mrb[0].mxu0
    %681 = vdwg.mxu0
    %v682 = vld [vmem:[#allocation2 + $0x2] sm:$0xff]
    %v683 = vld [vmem:[#allocation2 + $0xa] sm:$0xff]
    %v684 = vld [vmem:[#allocation2 + $0x1a] sm:$0xff]
    %v685 = vld [vmem:[#allocation2 + $0x22] sm:$0xff]
    %v686 = vpack.c.bf16 %v683, %v682
    %v687 = vpack.c.bf16 %v685, %v684
    %s688 = scalar_lea.vmem [#allocation5], 128
    %v689 = vld [vmem:[%s688] sm:$0xf]
    %v690 = vld [vmem:[%s688 + $0x4] sm:$0xf]
    %v691 = vld [vmem:[%s688 + $0x8] sm:$0xf]
    %v692 = vld [vmem:[%s688 + $0xc] sm:$0xf]
    %v693 = vld [vmem:[%s688 + $0x10] sm:$0xf]
    %v694 = vld [vmem:[%s688 + $0x14] sm:$0xf]
    %v695 = vld [vmem:[%s688 + $0x18] sm:$0xf]
    %v696 = vld [vmem:[%s688 + $0x1c] sm:$0xf]
    %v697 = vld [vmem:[%s688 + $0x20] sm:$0xf]
    %v698 = vld [vmem:[%s688 + $0x24] sm:$0xf]
    %v699 = vld [vmem:[%s688 + $0x28] sm:$0xf]
    %v700 = vld [vmem:[%s688 + $0x2c] sm:$0xf]
    %v701 = vld [vmem:[%s688 + $0x30] sm:$0xf]
    %v702 = vld [vmem:[%s688 + $0x34] sm:$0xf]
    %v703 = vld [vmem:[%s688 + $0x38] sm:$0xf]
    %v704 = vld [vmem:[%s688 + $0x3c] sm:$0xf]
    %v721 = vunpack.c.l.b16 %v689
    %v722 = vunpack.c.l.b16 %v690
    %v723 = vunpack.c.l.b16 %v691
    %v724 = vunpack.c.l.b16 %v692
    %v725 = vunpack.c.l.b16 %v693
    %v726 = vunpack.c.l.b16 %v694
    %v727 = vunpack.c.l.b16 %v695
    %v728 = vunpack.c.l.b16 %v696
    %v729 = vunpack.c.l.b16 %v697
    %v730 = vunpack.c.l.b16 %v698
    %v731 = vunpack.c.l.b16 %v699
    %v732 = vunpack.c.l.b16 %v700
    %v733 = vunpack.c.l.b16 %v701
    %v734 = vunpack.c.l.b16 %v702
    %v735 = vunpack.c.l.b16 %v703
    %v736 = vunpack.c.l.b16 %v704
    %v737 = vpack.c.b16 %v722, %v721
    %v738 = vpack.c.b16 %v724, %v723
    %v739 = vpack.c.b16 %v726, %v725
    %v740 = vpack.c.b16 %v728, %v727
    %v741 = vpack.c.b16 %v730, %v729
    %v742 = vpack.c.b16 %v732, %v731
    %v743 = vpack.c.b16 %v734, %v733
    %v744 = vpack.c.b16 %v736, %v735
    %753 = vmatprep.subr.bf16.mxu0 0
    %754 = vmatpush1.bf16.msra.mxu0 %v737
    %755 = vmatprep.subr.bf16.mxu0 0
    %756 = vmatpush1.bf16.msra.mxu0 %v738
    %757 = vmatprep.subr.bf16.mxu0 0
    %758 = vmatpush1.bf16.msra.mxu0 %v739
    %759 = vmatprep.subr.bf16.mxu0 0
    %760 = vmatpush1.bf16.msra.mxu0 %v740
    %761 = vmatprep.subr.bf16.mxu0 0
    %762 = vmatpush1.bf16.msra.mxu0 %v741
    %763 = vmatprep.subr.bf16.mxu0 0
    %764 = vmatpush1.bf16.msra.mxu0 %v742
    %765 = vmatprep.subr.bf16.mxu0 0
    %766 = vmatpush1.bf16.msra.mxu0 %v743
    %767 = vmatprep.subr.bf16.mxu0 0
    %768 = vmatpush1.bf16.msra.mxu0 %v744
    %769 = vmatprep.subr.bf16.mxu0 0
    %770 = vmatpush1.bf16.msra.mxu0 0
    %771 = vmatprep.subr.bf16.mxu0 0
    %772 = vmatpush1.bf16.msra.mxu0 0
    %773 = vmatprep.subr.bf16.mxu0 0
    %774 = vmatpush1.bf16.msra.mxu0 0
    %775 = vmatprep.subr.bf16.mxu0 0
    %776 = vmatpush1.bf16.msra.mxu0 0
    %777 = vmatprep.subr.bf16.mxu0 0
    %778 = vmatpush1.bf16.msra.mxu0 0
    %779 = vmatprep.subr.bf16.mxu0 0
    %780 = vmatpush1.bf16.msra.mxu0 0
    %781 = vmatprep.subr.bf16.mxu0 0
    %782 = vmatpush1.bf16.msra.mxu0 0
    %783 = vmatprep.subr.bf16.mxu0 0
    %784 = vmatpush1.bf16.msra.mxu0 0
    %785 = vmatprep.mubr.bf16.mxu0 0
    %786 = vmatmul.mubr.bf16.gmra.mrb[0].mxu0 %v686
    %v787 = vpop.f32.mrb[0].mxu0
    %v788 = vadd.f32 0.0, %v787
    %v789 = vpop.f32.mrb[0].mxu0
    %v790 = vpop.f32.mrb[0].mxu0
    %v791 = vadd.f32 0.0, %v790
    %v792 = vpop.f32.mrb[0].mxu0
    %793 = vmatprep.mubr.bf16.mxu0 0
    %794 = vmatmul.mubr.bf16.gmra.mrb[0].mxu0 %v687
    %v795 = vpop.f32.mrb[0].mxu0
    %v796 = vadd.f32 0.0, %v795
    %v797 = vpop.f32.mrb[0].mxu0
    %v798 = vpop.f32.mrb[0].mxu0
    %v799 = vadd.f32 0.0, %v798
    %v800 = vpop.f32.mrb[0].mxu0
    %801 = vdwg.mxu0
    %v802 = vadd.f32 %v668, %v788
    %v803 = vadd.f32 %v671, %v791
    %v804 = vadd.f32 %v676, %v796
    %v805 = vadd.f32 %v679, %v799
    %v806 = vld [vmem:[%s4] sm:$0x1]
    %v808 = vlaneseq
    %v809 = vshrl.u32 %v808, 7
    %v810 = vsub.s32 0, %v809
    %v811 = vrot.slane %v806, %v810
    %v813 = vadd.f32 %v802, %v811
    %v814 = vadd.f32 %v803, %v811
    %v815 = vadd.f32 %v804, %v811
    %v816 = vadd.f32 %v805, %v811
    %817 = vst [vmem:[%s5] sm:$0xff] %v813
    %818 = vst [vmem:[%s5 + $0x8] sm:$0xff] %v814
    %819 = vst [vmem:[%s5 + $0x10] sm:$0xff] %v815
    %820 = vst [vmem:[%s5 + $0x18] sm:$0xff] %v816
    // Predicated region
    $region30: #{forward.1} parent=1 // pred_check
      _
    $region31: #{forward.1} parent=1 // pred_check_branch
      %822 = sbr.rel (0) target = $region33
    $region32: #{forward.1} parent=1 // pred_region
      _
    $region33: #{forward.1} parent=1 // pred_fallthru
      _
    // Predicated region
    $region34: #{forward.1} parent=1 // pred_check
      _
    $region35: #{forward.1} parent=1 // pred_check_branch
      %824 = sbr.rel (0) target = $region37
    $region36: #{forward.1} parent=1 // pred_region
      _
    $region37: #{forward.1} parent=1 // pred_fallthru
      _
    %825 = vsyncpa [#allocation4], 1
    %826 = vsyncpa [#allocation6], 1

</llo_original>
